<compile_context>
chip_gen: v7x
topology: tpu7x:2x2x1
jax: 0.10.0
libtpu: 0.0.40
codegen_flags: <defaults>
</compile_context>

<pallas_src>
import functools

import numpy as np
import jax
import jax.numpy as jnp
from jax.experimental import pallas as pl

# ---------------------------------------------------------------- config ----
B = 2            # batch
C_IN = 4         # in_chans
H = W = 16       # image size
PATCH = 4        # encoder.patch_size == encoder_stride
HP, WP = H // PATCH, W // PATCH
L = HP * WP                       # patches per image
PATCH_DIM = C_IN * PATCH * PATCH  # flattened patch length
C_ENC = 32                        # encoder.num_features
NUM_TIMESTEPS = 1000
TEMPERATURE = 1.0                 # self.T
USE_CONTRASTIVE = True


# ------------------------------------------------- hoisted static tables ----
def _build_static_tables():
    """Compile-time constants (hoisted out of the kernel, review item 3).

    EXPAND (n_total, B*H*W): one-hot patch->pixel nearest-neighbour upsample;
      rows for aug patches are all-zero so aug columns drop out automatically.
    AVG (2B, n_total): per-image mean-pool over the aug patches only.
    """
    n_x = B * L
    n_total = (3 if USE_CONTRASTIVE else 1) * n_x
    npix = B * H * W
    q = np.arange(npix)
    bq = q // (H * W)
    rem = q % (H * W)
    pi, pj = rem // W, rem % W
    p = bq * L + (pi // PATCH) * WP + (pj // PATCH)
    expand = np.zeros((n_total, npix), np.float32)
    expand[p, q] = 1.0
    avg = np.zeros((2 * B, n_total), np.float32)
    if USE_CONTRASTIVE:
        k_all = np.arange(2 * n_x)
        avg[k_all // L, n_x + k_all] = 1.0 / L
    return expand, avg


EXPAND_NP, AVG_NP = _build_static_tables()
ALPHAS_CUMPROD_NP = np.cumprod(
    1.0 - np.linspace(1e-4, 2e-2, NUM_TIMESTEPS, dtype=np.float64)
).astype(np.float32)


# -------------------------------------------------------------- the kernel --
def _dmim_fused_kernel(patches_ref, mask_ref, wpT_ref, bp_ref, mtok_ref,
                       w1_ref, b1_ref, w2_ref, b2_ref, avg_ref,
                       xn_ref, eps_ref, expand_ref, wxT_ref, wcT_ref, bd_ref,
                       out_ref, *, batch, temperature, use_contrastive):
    """Whole dmimWithLDM forward in one VMEM-resident block.

    All matmuls: bf16 operands, f32 accumulation. All epilogue math: f32.
    """
    c_in = xn_ref.shape[0]

    # ---- encoder: channel-major patch embedding (C_ENC, n_total) -----------
    emb = jnp.dot(wpT_ref[...], patches_ref[...],
                  preferred_element_type=jnp.float32) + bp_ref[...]
    # SimMIM mask-token substitution; mask is 0 on aug columns -> no-op there.
    m = mask_ref[...]                                        # (1, n_total)
    emb = emb * (1.0 - m) + mtok_ref[...] * m
    emb_bf = emb.astype(jnp.bfloat16)

    # ---- contrastive branch (header + MoCo-style CE) ------------------------
    loss_contrastive = jnp.zeros((1, 1), jnp.float32)
    if use_contrastive:
        # per-image mean pool of aug patches: (2B, n_total) x (C_ENC, n_total)^T
        f = jax.lax.dot_general(avg_ref[...], emb_bf, (((1,), (1,)), ((), ())),
                                preferred_element_type=jnp.float32)   # (2B, C)
        h = jnp.dot(f.astype(jnp.bfloat16), w1_ref[...],
                    preferred_element_type=jnp.float32) + b1_ref[...]
        h = jax.nn.gelu(h)
        zz = jnp.dot(h.astype(jnp.bfloat16), w2_ref[...],
                     preferred_element_type=jnp.float32) + b2_ref[...]  # (2B, C)
        # rows [:batch] = z_1 (grad), rows [batch:] = z_2 (torch.no_grad branch;
        # forward value identical).
        zn = zz * jax.lax.rsqrt(
            jnp.maximum(jnp.sum(zz * zz, axis=1, keepdims=True), 1e-24))
        zn_bf = zn.astype(jnp.bfloat16)
        gram = jax.lax.dot_general(zn_bf, zn_bf, (((1,), (1,)), ((), ())),
                                   preferred_element_type=jnp.float32)
        gram = gram / temperature
        g = 2 * batch
        ri = jax.lax.broadcasted_iota(jnp.int32, (g, g), 0)
        ci = jax.lax.broadcasted_iota(jnp.int32, (g, g), 1)
        key_col = ci >= batch                               # columns of z_2
        mx = jnp.max(jnp.where(key_col, gram, -1e30), axis=1, keepdims=True)
        lse = mx + jnp.log(jnp.sum(jnp.where(key_col, jnp.exp(gram - mx), 0.0),
                                   axis=1, keepdims=True))
        pos = jnp.sum(jnp.where(ci == ri + batch, gram, 0.0),
                      axis=1, keepdims=True)
        is_q_row = (jax.lax.broadcasted_iota(jnp.int32, (g, 1), 0) < batch
                    ).astype(jnp.float32)
        ce = jnp.sum((lse - pos) * is_q_row, axis=0, keepdims=True)
        # CE(q1 k2^T / T, arange) * 2T / 20   (world_size = 1)
        loss_contrastive = ce * (2.0 * temperature / (20.0 * batch))

    # ---- diffusion: noise prediction + masked MSE ---------------------------
    # condition contribution at patch resolution (aug columns zeroed by EXPAND)
    wcz = jnp.dot(wcT_ref[...], emb_bf,
                  preferred_element_type=jnp.float32)        # (C_IN, n_total)
    cond_pix = jnp.dot(wcz.astype(jnp.bfloat16), expand_ref[...],
                       preferred_element_type=jnp.float32)   # (C_IN, npix)
    # pixel mask == (mask_x(ones_like(x), mask) == 0): same one-hot upsample.
    mask_pix = jnp.dot(m.astype(jnp.bfloat16), expand_ref[...],
                       preferred_element_type=jnp.float32)   # (1, npix)
    # per-pixel noise prediction (small 1x1 conv; kept on the MXU since the
    # whole kernel is a single launch and these matmuls are not the bottleneck)
    pred = jnp.dot(wxT_ref[...], xn_ref[...],
                   preferred_element_type=jnp.float32) + cond_pix + bd_ref[...]
    diff = pred - eps_ref[...]
    num = jnp.sum(diff * diff * mask_pix, axis=(0, 1), keepdims=True)
    den = jnp.sum(mask_pix, axis=(0, 1), keepdims=True) * float(c_in)
    loss_recon = num / jnp.maximum(den, 1.0)

    out_ref[...] = loss_recon + loss_contrastive


def _dmim_fused_call(params, patches, mask_full, x_noisy, eps_cm,
                     expand_bf, avg_bf):
    # Single block, everything VMEM-resident; grid omitted on purpose (one
    # invocation, no pipeline prologue, no revisits of constant operands).
    # TODO(synk): for realistic B/H/W, tile the diffusion part over batch so
    # EXPAND becomes (L, H*W) per step (v7x has only 64 MiB VMEM).
    out = pl.pallas_call(
        functools.partial(_dmim_fused_kernel, batch=B,
                          temperature=TEMPERATURE,
                          use_contrastive=USE_CONTRASTIVE),
        out_shape=jax.ShapeDtypeStruct((1, 1), jnp.float32),
    )(patches, mask_full, params["w_patch_T"], params["b_patch"],
      params["mask_token"], params["w1"], params["b1"], params["w2"],
      params["b2"], avg_bf, x_noisy, eps_cm, expand_bf,
      params["wxT"], params["wcT"], params["bd"])
    return out[0, 0]


# ------------------------------------------------------------ forward pass --
def dmim_forward(params, x, mask, augmented_pair, key):
    """dmimWithLDM.forward (training loss)."""
    b = x.shape[0]

    # --- patch extraction, channel-major (PATCH_DIM, n_total), bf16 ---------
    if USE_CONTRASTIVE:
        aug_1, aug_2 = augmented_pair
        imgs = jnp.stack([x, aug_1, aug_2], axis=0).astype(jnp.bfloat16)
    else:
        imgs = x[None].astype(jnp.bfloat16)
    g = imgs.shape[0]
    patches = imgs.reshape(g, b, C_IN, HP, PATCH, WP, PATCH)
    patches = patches.transpose(2, 4, 6, 0, 1, 3, 5).reshape(PATCH_DIM,
                                                             g * b * L)
    mask_x_cols = mask.reshape(1, b * L).astype(jnp.float32)
    if USE_CONTRASTIVE:
        mask_full = jnp.concatenate(
            [mask_x_cols, jnp.zeros((1, 2 * b * L), jnp.float32)], axis=1)
    else:
        mask_full = mask_x_cols

    # --- diffusion noising (synthetic DDPM stand-in), channel-major ---------
    tkey, nkey = jax.random.split(key)
    t = jax.random.randint(tkey, (b,), 0, NUM_TIMESTEPS)
    acp = jnp.asarray(ALPHAS_CUMPROD_NP)
    sa = jnp.sqrt(acp[t])[None, :, None, None]
    so = jnp.sqrt(1.0 - acp[t])[None, :, None, None]
    # TODO(synk): this (C,B,H,W) transpose of x is the one remaining layout
    # copy outside the kernel; eps is generated channel-major directly.
    x_cm = jnp.transpose(x, (1, 0, 2, 3)).astype(jnp.float32)
    eps = jax.random.normal(nkey, x_cm.shape, jnp.float32)
    x_noisy = (sa * x_cm + so * eps).astype(jnp.bfloat16).reshape(C_IN,
                                                                  b * H * W)
    eps_cm = eps.reshape(C_IN, b * H * W)

    # TODO(synk): torch.distributed all_gather / rank offset assumed
    # world_size=1 (concat_all_gather is identity, labels = arange(N)).
    return _dmim_fused_call(params, patches, mask_full, x_noisy, eps_cm,
                            jnp.asarray(EXPAND_NP, jnp.bfloat16),
                            jnp.asarray(AVG_NP, jnp.bfloat16))


# ------------------------------------------------------------------ params --
def make_params(key):
    ks = jax.random.split(key, 8)
    s = 0.02
    f32, bf16 = jnp.float32, jnp.bfloat16
    return {
        # encoder (patch conv weight, pre-transposed (C_ENC, C*p*p), bf16)
        "w_patch_T": (s * jax.random.normal(ks[0], (C_ENC, PATCH_DIM), f32)
                      ).astype(bf16),
        "b_patch": jnp.zeros((C_ENC, 1), f32),
        "mask_token": s * jax.random.normal(ks[1], (C_ENC, 1), f32),
        # contrastive Mlp header (hidden = out = num_features), bf16 weights
        "w1": (s * jax.random.normal(ks[2], (C_ENC, C_ENC), f32)).astype(bf16),
        "b1": jnp.zeros((1, C_ENC), f32),
        "w2": (s * jax.random.normal(ks[3], (C_ENC, C_ENC), f32)).astype(bf16),
        "b2": jnp.zeros((1, C_ENC), f32),
        # diffusion denoiser (1x1 convs), channel-major, bf16 MXU operands
        "wxT": (s * jax.random.normal(ks[4], (C_IN, C_IN), f32)).astype(bf16),
        "wcT": (s * jax.random.normal(ks[5], (C_IN, C_ENC), f32)).astype(bf16),
        "bd": jnp.zeros((C_IN, 1), f32),
    }


# -------------------------------------------------------------------- main --
if __name__ == "__main__":
    root = jax.random.PRNGKey(0)
    k_param, k_x, k_a1, k_a2, k_mask, k_diff = jax.random.split(root, 6)

    params = make_params(k_param)
    x = jax.random.normal(k_x, (B, C_IN, H, W), jnp.float32)
    aug_1 = jax.random.normal(k_a1, (B, C_IN, H, W), jnp.float32)
    aug_2 = jax.random.normal(k_a2, (B, C_IN, H, W), jnp.float32)
    mask = jax.random.bernoulli(k_mask, 0.5, (B, HP, WP)).astype(jnp.int32)

    fwd = jax.jit(
        lambda p, xx, mm, a1, a2: dmim_forward(p, xx, mm, (a1, a2), k_diff))
    loss = fwd(params, x, mask, aug_1, aug_2)
    jax.block_until_ready(loss)
    assert loss.shape == () and jnp.isfinite(loss)
    print("KERNEL_OK")
</pallas_src>

<mosaic_0001>
module attributes {stable_mosaic.version = 11 : i64} {
  func.func @_dmim_fused_kernel(%arg0: memref<64x96xbf16, #tpu.memory_space<vmem>>, %arg1: memref<1x96xf32, #tpu.memory_space<vmem>>, %arg2: memref<32x64xbf16, #tpu.memory_space<vmem>>, %arg3: memref<32x1xf32, #tpu.memory_space<vmem>>, %arg4: memref<32x1xf32, #tpu.memory_space<vmem>>, %arg5: memref<32x32xbf16, #tpu.memory_space<vmem>>, %arg6: memref<1x32xf32, #tpu.memory_space<vmem>>, %arg7: memref<32x32xbf16, #tpu.memory_space<vmem>>, %arg8: memref<1x32xf32, #tpu.memory_space<vmem>>, %arg9: memref<4x96xbf16, #tpu.memory_space<vmem>>, %arg10: memref<4x512xbf16, #tpu.memory_space<vmem>>, %arg11: memref<4x512xf32, #tpu.memory_space<vmem>>, %arg12: memref<96x512xbf16, #tpu.memory_space<vmem>>, %arg13: memref<4x4xbf16, #tpu.memory_space<vmem>>, %arg14: memref<4x32xbf16, #tpu.memory_space<vmem>>, %arg15: memref<4x1xf32, #tpu.memory_space<vmem>>, %arg16: memref<1x1xf32, #tpu.memory_space<vmem>>) attributes {dimension_semantics = [], scalar_prefetch = 0 : i64, scratch_operands = 0 : i64, tpu.core_type = #tpu.core_type<tc>} {
    %c0 = arith.constant 0 : index
    %c0_0 = arith.constant 0 : index
    %0 = vector.load %arg2[%c0, %c0_0] : memref<32x64xbf16, #tpu.memory_space<vmem>>, vector<32x64xbf16>
    %c0_1 = arith.constant 0 : index
    %c0_2 = arith.constant 0 : index
    %1 = vector.load %arg0[%c0_1, %c0_2] : memref<64x96xbf16, #tpu.memory_space<vmem>>, vector<64x96xbf16>
    %cst = arith.constant dense<0.000000e+00> : vector<32x96xf32>
    %2 = tpu.matmul %0, %1, %cst {dimension_numbers = #tpu.dot_dimension_numbers<[1], [0], [0], [1], [0, 0, 1, 1], [], []>} : vector<32x64xbf16>, vector<64x96xbf16>, vector<32x96xf32> -> vector<32x96xf32>
    %c0_3 = arith.constant 0 : index
    %c0_4 = arith.constant 0 : index
    %3 = vector.load %arg3[%c0_3, %c0_4] : memref<32x1xf32, #tpu.memory_space<vmem>>, vector<32x1xf32>
    %4 = vector.broadcast %3 : vector<32x1xf32> to vector<32x96xf32>
    %5 = arith.addf %2, %4 : vector<32x96xf32>
    %c0_5 = arith.constant 0 : index
    %c0_6 = arith.constant 0 : index
    %6 = vector.load %arg1[%c0_5, %c0_6] : memref<1x96xf32, #tpu.memory_space<vmem>>, vector<1x96xf32>
    %cst_7 = arith.constant 1.000000e+00 : f32
    %7 = vector.broadcast %cst_7 : f32 to vector<1x96xf32>
    %8 = arith.subf %7, %6 : vector<1x96xf32>
    %9 = vector.broadcast %8 : vector<1x96xf32> to vector<32x96xf32>
    %10 = arith.mulf %5, %9 : vector<32x96xf32>
    %c0_8 = arith.constant 0 : index
    %c0_9 = arith.constant 0 : index
    %11 = vector.load %arg4[%c0_8, %c0_9] : memref<32x1xf32, #tpu.memory_space<vmem>>, vector<32x1xf32>
    %12 = vector.broadcast %11 : vector<32x1xf32> to vector<32x96xf32>
    %13 = vector.broadcast %6 : vector<1x96xf32> to vector<32x96xf32>
    %14 = arith.mulf %12, %13 : vector<32x96xf32>
    %15 = arith.addf %10, %14 : vector<32x96xf32>
    %16 = arith.truncf %15 : vector<32x96xf32> to vector<32x96xbf16>
    %c0_10 = arith.constant 0 : index
    %c0_11 = arith.constant 0 : index
    %17 = vector.load %arg9[%c0_10, %c0_11] : memref<4x96xbf16, #tpu.memory_space<vmem>>, vector<4x96xbf16>
    %cst_12 = arith.constant dense<0.000000e+00> : vector<4x32xf32>
    %18 = tpu.matmul %17, %16, %cst_12 {dimension_numbers = #tpu.dot_dimension_numbers<[1], [1], [0], [0], [0, 0, 1, 0], [], []>} : vector<4x96xbf16>, vector<32x96xbf16>, vector<4x32xf32> -> vector<4x32xf32>
    %19 = arith.truncf %18 : vector<4x32xf32> to vector<4x32xbf16>
    %c0_13 = arith.constant 0 : index
    %c0_14 = arith.constant 0 : index
    %20 = vector.load %arg5[%c0_13, %c0_14] : memref<32x32xbf16, #tpu.memory_space<vmem>>, vector<32x32xbf16>
    %cst_15 = arith.constant dense<0.000000e+00> : vector<4x32xf32>
    %21 = tpu.matmul %19, %20, %cst_15 {dimension_numbers = #tpu.dot_dimension_numbers<[1], [0], [0], [1], [0, 0, 1, 1], [], []>} : vector<4x32xbf16>, vector<32x32xbf16>, vector<4x32xf32> -> vector<4x32xf32>
    %c0_16 = arith.constant 0 : index
    %c0_17 = arith.constant 0 : index
    %22 = vector.load %arg6[%c0_16, %c0_17] : memref<1x32xf32, #tpu.memory_space<vmem>>, vector<1x32xf32>
    %23 = vector.broadcast %22 : vector<1x32xf32> to vector<4x32xf32>
    %24 = arith.addf %21, %23 : vector<4x32xf32>
    %25 = arith.mulf %24, %24 : vector<4x32xf32>
    %26 = arith.mulf %24, %25 : vector<4x32xf32>
    %cst_18 = arith.constant 4.471500e-02 : f32
    %27 = vector.broadcast %cst_18 : f32 to vector<4x32xf32>
    %28 = arith.mulf %27, %26 : vector<4x32xf32>
    %29 = arith.addf %24, %28 : vector<4x32xf32>
    %cst_19 = arith.constant 0.797884583 : f32
    %30 = vector.broadcast %cst_19 : f32 to vector<4x32xf32>
    %31 = arith.mulf %30, %29 : vector<4x32xf32>
    %32 = math.tanh %31 : vector<4x32xf32>
    %cst_20 = arith.constant 1.000000e+00 : f32
    %33 = vector.broadcast %cst_20 : f32 to vector<4x32xf32>
    %34 = arith.addf %33, %32 : vector<4x32xf32>
    %cst_21 = arith.constant 5.000000e-01 : f32
    %35 = vector.broadcast %cst_21 : f32 to vector<4x32xf32>
    %36 = arith.mulf %35, %34 : vector<4x32xf32>
    %37 = arith.mulf %24, %36 : vector<4x32xf32>
    %38 = arith.truncf %37 : vector<4x32xf32> to vector<4x32xbf16>
    %c0_22 = arith.constant 0 : index
    %c0_23 = arith.constant 0 : index
    %39 = vector.load %arg7[%c0_22, %c0_23] : memref<32x32xbf16, #tpu.memory_space<vmem>>, vector<32x32xbf16>
    %cst_24 = arith.constant dense<0.000000e+00> : vector<4x32xf32>
    %40 = tpu.matmul %38, %39, %cst_24 {dimension_numbers = #tpu.dot_dimension_numbers<[1], [0], [0], [1], [0, 0, 1, 1], [], []>} : vector<4x32xbf16>, vector<32x32xbf16>, vector<4x32xf32> -> vector<4x32xf32>
    %c0_25 = arith.constant 0 : index
    %c0_26 = arith.constant 0 : index
    %41 = vector.load %arg8[%c0_25, %c0_26] : memref<1x32xf32, #tpu.memory_space<vmem>>, vector<1x32xf32>
    %42 = vector.broadcast %41 : vector<1x32xf32> to vector<4x32xf32>
    %43 = arith.addf %40, %42 : vector<4x32xf32>
    %44 = arith.mulf %43, %43 : vector<4x32xf32>
    %cst_27 = arith.constant dense<0.000000e+00> : vector<4xf32>
    %45 = vector.multi_reduction <add>, %44, %cst_27 [1] : vector<4x32xf32> to vector<4xf32>
    %46 = vector.shape_cast %45 : vector<4xf32> to vector<4x1xf32>
    %cst_28 = arith.constant 1.000000e-24 : f32
    %47 = vector.broadcast %cst_28 : f32 to vector<4x1xf32>
    %48 = arith.maximumf %46, %47 : vector<4x1xf32>
    %49 = math.rsqrt %48 : vector<4x1xf32>
    %50 = vector.broadcast %49 : vector<4x1xf32> to vector<4x32xf32>
    %51 = arith.mulf %43, %50 : vector<4x32xf32>
    %52 = arith.truncf %51 : vector<4x32xf32> to vector<4x32xbf16>
    %cst_29 = arith.constant dense<0.000000e+00> : vector<4x4xf32>
    %53 = tpu.matmul %52, %52, %cst_29 {dimension_numbers = #tpu.dot_dimension_numbers<[1], [1], [0], [0], [0, 0, 1, 0], [], []>} : vector<4x32xbf16>, vector<4x32xbf16>, vector<4x4xf32> -> vector<4x4xf32>
    %cst_30 = arith.constant 1.000000e+00 : f32
    %54 = vector.broadcast %cst_30 : f32 to vector<4x4xf32>
    %55 = arith.divf %53, %54 : vector<4x4xf32>
    %56 = tpu.iota {dimensions = array<i32: 0>} : vector<4x4xi32>
    %57 = tpu.iota {dimensions = array<i32: 1>} : vector<4x4xi32>
    %c2_i32 = arith.constant 2 : i32
    %58 = vector.broadcast %c2_i32 : i32 to vector<4x4xi32>
    %59 = arith.cmpi sge, %57, %58 : vector<4x4xi32>
    %cst_31 = arith.constant -1.000000e+30 : f32
    %60 = vector.broadcast %cst_31 : f32 to vector<4x4xf32>
    %61 = arith.select %59, %55, %60 : vector<4x4xi1>, vector<4x4xf32>
    %cst_32 = arith.constant dense<0xFF800000> : vector<4xf32>
    %62 = vector.multi_reduction <maximumf>, %61, %cst_32 [1] : vector<4x4xf32> to vector<4xf32>
    %63 = vector.shape_cast %62 : vector<4xf32> to vector<4x1xf32>
    %64 = vector.broadcast %63 : vector<4x1xf32> to vector<4x4xf32>
    %65 = arith.subf %55, %64 : vector<4x4xf32>
    %66 = math.exp %65 : vector<4x4xf32>
    %cst_33 = arith.constant 0.000000e+00 : f32
    %67 = vector.broadcast %cst_33 : f32 to vector<4x4xf32>
    %68 = arith.select %59, %66, %67 : vector<4x4xi1>, vector<4x4xf32>
    %cst_34 = arith.constant dense<0.000000e+00> : vector<4xf32>
    %69 = vector.multi_reduction <add>, %68, %cst_34 [1] : vector<4x4xf32> to vector<4xf32>
    %70 = vector.shape_cast %69 : vector<4xf32> to vector<4x1xf32>
    %71 = math.log %70 : vector<4x1xf32>
    %72 = arith.addf %63, %71 : vector<4x1xf32>
    %c2_i32_35 = arith.constant 2 : i32
    %73 = vector.broadcast %c2_i32_35 : i32 to vector<4x4xi32>
    %74 = arith.addi %56, %73 : vector<4x4xi32>
    %75 = arith.cmpi eq, %57, %74 : vector<4x4xi32>
    %cst_36 = arith.constant 0.000000e+00 : f32
    %76 = vector.broadcast %cst_36 : f32 to vector<4x4xf32>
    %77 = arith.select %75, %55, %76 : vector<4x4xi1>, vector<4x4xf32>
    %cst_37 = arith.constant dense<0.000000e+00> : vector<4xf32>
    %78 = vector.multi_reduction <add>, %77, %cst_37 [1] : vector<4x4xf32> to vector<4xf32>
    %79 = vector.shape_cast %78 : vector<4xf32> to vector<4x1xf32>
    %80 = tpu.iota {dimensions = array<i32: 0>} : vector<4x1xi32>
    %c2_i32_38 = arith.constant 2 : i32
    %81 = vector.broadcast %c2_i32_38 : i32 to vector<4x1xi32>
    %82 = arith.cmpi slt, %80, %81 : vector<4x1xi32>
    %83 = arith.extui %82 : vector<4x1xi1> to vector<4x1xi32>
    %84 = arith.sitofp %83 : vector<4x1xi32> to vector<4x1xf32>
    %85 = arith.subf %72, %79 : vector<4x1xf32>
    %86 = arith.mulf %85, %84 : vector<4x1xf32>
    %cst_39 = arith.constant dense<0.000000e+00> : vector<1xf32>
    %87 = vector.multi_reduction <add>, %86, %cst_39 [0] : vector<4x1xf32> to vector<1xf32>
    %88 = vector.shape_cast %87 : vector<1xf32> to vector<1x1xf32>
    %cst_40 = arith.constant 5.000000e-02 : f32
    %89 = vector.broadcast %cst_40 : f32 to vector<1x1xf32>
    %90 = arith.mulf %88, %89 : vector<1x1xf32>
    %c0_41 = arith.constant 0 : index
    %c0_42 = arith.constant 0 : index
    %91 = vector.load %arg14[%c0_41, %c0_42] : memref<4x32xbf16, #tpu.memory_space<vmem>>, vector<4x32xbf16>
    %cst_43 = arith.constant dense<0.000000e+00> : vector<4x96xf32>
    %92 = tpu.matmul %91, %16, %cst_43 {dimension_numbers = #tpu.dot_dimension_numbers<[1], [0], [0], [1], [0, 0, 1, 1], [], []>} : vector<4x32xbf16>, vector<32x96xbf16>, vector<4x96xf32> -> vector<4x96xf32>
    %93 = arith.truncf %92 : vector<4x96xf32> to vector<4x96xbf16>
    %c0_44 = arith.constant 0 : index
    %c0_45 = arith.constant 0 : index
    %94 = vector.load %arg12[%c0_44, %c0_45] : memref<96x512xbf16, #tpu.memory_space<vmem>>, vector<96x512xbf16>
    %cst_46 = arith.constant dense<0.000000e+00> : vector<4x512xf32>
    %95 = tpu.matmul %93, %94, %cst_46 {dimension_numbers = #tpu.dot_dimension_numbers<[1], [0], [0], [1], [0, 0, 1, 1], [], []>} : vector<4x96xbf16>, vector<96x512xbf16>, vector<4x512xf32> -> vector<4x512xf32>
    %96 = arith.truncf %6 : vector<1x96xf32> to vector<1x96xbf16>
    %c0_47 = arith.constant 0 : index
    %c0_48 = arith.constant 0 : index
    %97 = vector.load %arg12[%c0_47, %c0_48] : memref<96x512xbf16, #tpu.memory_space<vmem>>, vector<96x512xbf16>
    %cst_49 = arith.constant dense<0.000000e+00> : vector<1x512xf32>
    %98 = tpu.matmul %96, %97, %cst_49 {dimension_numbers = #tpu.dot_dimension_numbers<[1], [0], [0], [1], [0, 0, 1, 1], [], []>} : vector<1x96xbf16>, vector<96x512xbf16>, vector<1x512xf32> -> vector<1x512xf32>
    %c0_50 = arith.constant 0 : index
    %c0_51 = arith.constant 0 : index
    %99 = vector.load %arg13[%c0_50, %c0_51] : memref<4x4xbf16, #tpu.memory_space<vmem>>, vector<4x4xbf16>
    %c0_52 = arith.constant 0 : index
    %c0_53 = arith.constant 0 : index
    %100 = vector.load %arg10[%c0_52, %c0_53] : memref<4x512xbf16, #tpu.memory_space<vmem>>, vector<4x512xbf16>
    %cst_54 = arith.constant dense<0.000000e+00> : vector<4x512xf32>
    %101 = tpu.matmul %99, %100, %cst_54 {dimension_numbers = #tpu.dot_dimension_numbers<[1], [0], [0], [1], [0, 0, 1, 1], [], []>} : vector<4x4xbf16>, vector<4x512xbf16>, vector<4x512xf32> -> vector<4x512xf32>
    %102 = arith.addf %101, %95 : vector<4x512xf32>
    %c0_55 = arith.constant 0 : index
    %c0_56 = arith.constant 0 : index
    %103 = vector.load %arg15[%c0_55, %c0_56] : memref<4x1xf32, #tpu.memory_space<vmem>>, vector<4x1xf32>
    %104 = vector.broadcast %103 : vector<4x1xf32> to vector<4x512xf32>
    %105 = arith.addf %102, %104 : vector<4x512xf32>
    %c0_57 = arith.constant 0 : index
    %c0_58 = arith.constant 0 : index
    %106 = vector.load %arg11[%c0_57, %c0_58] : memref<4x512xf32, #tpu.memory_space<vmem>>, vector<4x512xf32>
    %107 = arith.subf %105, %106 : vector<4x512xf32>
    %108 = arith.mulf %107, %107 : vector<4x512xf32>
    %109 = vector.broadcast %98 : vector<1x512xf32> to vector<4x512xf32>
    %110 = arith.mulf %108, %109 : vector<4x512xf32>
    %111 = vector.shape_cast %110 : vector<4x512xf32> to vector<1x4x512xf32>
    %cst_59 = arith.constant dense<0.000000e+00> : vector<1xf32>
    %112 = vector.multi_reduction <add>, %111, %cst_59 [1, 2] : vector<1x4x512xf32> to vector<1xf32>
    %113 = vector.shape_cast %112 : vector<1xf32> to vector<1x1x1xf32>
    %114 = vector.extract %113[0, 0, 0] : f32 from vector<1x1x1xf32>
    %115 = vector.broadcast %114 : f32 to vector<1x1xf32>
    %116 = vector.shape_cast %98 : vector<1x512xf32> to vector<1x1x512xf32>
    %cst_60 = arith.constant dense<0.000000e+00> : vector<1xf32>
    %117 = vector.multi_reduction <add>, %116, %cst_60 [1, 2] : vector<1x1x512xf32> to vector<1xf32>
    %118 = vector.shape_cast %117 : vector<1xf32> to vector<1x1x1xf32>
    %119 = vector.extract %118[0, 0, 0] : f32 from vector<1x1x1xf32>
    %120 = vector.broadcast %119 : f32 to vector<1x1xf32>
    %cst_61 = arith.constant 4.000000e+00 : f32
    %121 = vector.broadcast %cst_61 : f32 to vector<1x1xf32>
    %122 = arith.mulf %120, %121 : vector<1x1xf32>
    %cst_62 = arith.constant 1.000000e+00 : f32
    %123 = vector.broadcast %cst_62 : f32 to vector<1x1xf32>
    %124 = arith.maximumf %122, %123 : vector<1x1xf32>
    %125 = arith.divf %115, %124 : vector<1x1xf32>
    %126 = arith.addf %125, %90 : vector<1x1xf32>
    %c0_63 = arith.constant 0 : index
    %c0_64 = arith.constant 0 : index
    %127 = vector.load %arg16[%c0_63, %c0_64] : memref<1x1xf32, #tpu.memory_space<vmem>>, vector<1x1xf32>
    tpu.vector_store %arg16[%c0_63, %c0_64], %126 {strides = array<i32>} : memref<1x1xf32, #tpu.memory_space<vmem>>, vector<1x1xf32>,
    return
  }
}

</mosaic_0001>

<llo_original>
// kernel: _lambda_.1
$region0: #{_lambda_.1}
  #allocation0 [shape = 'u32[]', space=smem, size = 0x4, offset = 0x4, fixed_abs, tag = 'smem constant byte address 0x4 - core index']
  #allocation1 [shape = 'u32[144,128]{1,0:T(1,128)}', space=vmem, size = 0x12000, scoped, tag = 'internal scratch']
  %s0 = inlined_call_operand.vmem [shape: bf16[64,96], index: 0, kind: input, shape index: {}]
  %s1 = inlined_call_operand.vmem [shape: f32[1,96], index: 1, kind: input, shape index: {}]
  %s2 = inlined_call_operand.vmem [shape: bf16[32,64], index: 2, kind: input, shape index: {}]
  %s3 = inlined_call_operand.vmem [shape: f32[32,1], index: 3, kind: input, shape index: {}]
  %s4 = inlined_call_operand.vmem [shape: f32[32,1], index: 4, kind: input, shape index: {}]
  %s5 = inlined_call_operand.vmem [shape: bf16[32,32], index: 5, kind: input, shape index: {}]
  %s6 = inlined_call_operand.vmem [shape: f32[1,32], index: 6, kind: input, shape index: {}]
  %s7 = inlined_call_operand.vmem [shape: bf16[32,32], index: 7, kind: input, shape index: {}]
  %s8 = inlined_call_operand.vmem [shape: f32[1,32], index: 8, kind: input, shape index: {}]
  %s9 = inlined_call_operand.vmem [shape: bf16[4,96], index: 9, kind: input, shape index: {}]
  %s10 = inlined_call_operand.vmem [shape: bf16[4,512], index: 10, kind: input, shape index: {}]
  %s11 = inlined_call_operand.vmem [shape: f32[4,512], index: 11, kind: input, shape index: {}]
  %s12 = inlined_call_operand.vmem [shape: bf16[96,512], index: 12, kind: input, shape index: {}]
  %s13 = inlined_call_operand.vmem [shape: bf16[4,4], index: 13, kind: input, shape index: {}]
  %s14 = inlined_call_operand.vmem [shape: bf16[4,32], index: 14, kind: input, shape index: {}]
  %s15 = inlined_call_operand.vmem [shape: f32[4,1], index: 15, kind: input, shape index: {}]
  %s16 = inlined_call_operand.hbm [shape: f32[1,1], index: 16, kind: output, shape index: {}]
  %s17 = sld [smem:[#allocation0]]
  $region74: #{_lambda_.1} parent=0
    _
  %s19 = ssub.s32 1, %s17
  %s20 = scalar_select 0, %s19, %s17
  $region1: #{_lambda_.1} parent=0
    #allocation2 [shape = 'u8[512]{0}', space=vmem, size = 0x400, scoped, tag = 'output window, operand 0, single buffered']
    #allocation3 [shape = 's32[1]{0}', space=sflag, size = 0x4, scoped, tag = 'scoped memory for _lambda_.1']
    %21 = vsyncpa [#allocation3], 0
    // Predicated region
    $region2: #{_lambda_.1} parent=1 // pred_check
      _
    $region3: #{_lambda_.1} parent=1 // pred_check_branch
      %23 = sbr.rel (0) target = $region5
    $region4: #{_lambda_.1} parent=1 // pred_region
      _
    $region5: #{_lambda_.1} parent=1 // pred_fallthru
      _
    // Predicated region
    $region6: #{_lambda_.1} parent=1 // pred_check
      _
    $region7: #{_lambda_.1} parent=1 // pred_check_branch
      %25 = sbr.rel (0) target = $region9
    $region8: #{_lambda_.1} parent=1 // pred_region
      _
    $region9: #{_lambda_.1} parent=1 // pred_fallthru
      _
    // Predicated region
    $region10: #{_lambda_.1} parent=1 // pred_check
      _
    $region11: #{_lambda_.1} parent=1 // pred_check_branch
      %27 = sbr.rel (0) target = $region13
    $region12: #{_lambda_.1} parent=1 // pred_region
      _
    $region13: #{_lambda_.1} parent=1 // pred_fallthru
      _
    // Predicated region
    $region14: #{_lambda_.1} parent=1 // pred_check
      _
    $region15: #{_lambda_.1} parent=1 // pred_check_branch
      %29 = sbr.rel (0) target = $region17
    $region16: #{_lambda_.1} parent=1 // pred_region
      _
    $region17: #{_lambda_.1} parent=1 // pred_fallthru
      _
    // Predicated region
    $region18: #{_lambda_.1} parent=1 // pred_check
      _
    $region19: #{_lambda_.1} parent=1 // pred_check_branch
      %31 = sbr.rel (0) target = $region21
    $region20: #{_lambda_.1} parent=1 // pred_region
      _
    $region21: #{_lambda_.1} parent=1 // pred_fallthru
      _
    // Predicated region
    $region22: #{_lambda_.1} parent=1 // pred_check
      _
    $region23: #{_lambda_.1} parent=1 // pred_check_branch
      %33 = sbr.rel (0) target = $region25
    $region24: #{_lambda_.1} parent=1 // pred_region
      _
    $region25: #{_lambda_.1} parent=1 // pred_fallthru
      _
    // Predicated region
    $region26: #{_lambda_.1} parent=1 // pred_check
      _
    $region27: #{_lambda_.1} parent=1 // pred_check_branch
      %35 = sbr.rel (0) target = $region29
    $region28: #{_lambda_.1} parent=1 // pred_region
      _
    $region29: #{_lambda_.1} parent=1 // pred_fallthru
      _
    // Predicated region
    $region30: #{_lambda_.1} parent=1 // pred_check
      _
    $region31: #{_lambda_.1} parent=1 // pred_check_branch
      %37 = sbr.rel (0) target = $region33
    $region32: #{_lambda_.1} parent=1 // pred_region
      _
    $region33: #{_lambda_.1} parent=1 // pred_fallthru
      _
    // Predicated region
    $region34: #{_lambda_.1} parent=1 // pred_check
      _
    $region35: #{_lambda_.1} parent=1 // pred_check_branch
      %39 = sbr.rel (0) target = $region37
    $region36: #{_lambda_.1} parent=1 // pred_region
      _
    $region37: #{_lambda_.1} parent=1 // pred_fallthru
      _
    // Predicated region
    $region38: #{_lambda_.1} parent=1 // pred_check
      _
    $region39: #{_lambda_.1} parent=1 // pred_check_branch
      %41 = sbr.rel (0) target = $region41
    $region40: #{_lambda_.1} parent=1 // pred_region
      _
    $region41: #{_lambda_.1} parent=1 // pred_fallthru
      _
    // Predicated region
    $region42: #{_lambda_.1} parent=1 // pred_check
      _
    $region43: #{_lambda_.1} parent=1 // pred_check_branch
      %43 = sbr.rel (0) target = $region45
    $region44: #{_lambda_.1} parent=1 // pred_region
      _
    $region45: #{_lambda_.1} parent=1 // pred_fallthru
      _
    // Predicated region
    $region46: #{_lambda_.1} parent=1 // pred_check
      _
    $region47: #{_lambda_.1} parent=1 // pred_check_branch
      %45 = sbr.rel (0) target = $region49
    $region48: #{_lambda_.1} parent=1 // pred_region
      _
    $region49: #{_lambda_.1} parent=1 // pred_fallthru
      _
    // Predicated region
    $region50: #{_lambda_.1} parent=1 // pred_check
      _
    $region51: #{_lambda_.1} parent=1 // pred_check_branch
      %47 = sbr.rel (0) target = $region53
    $region52: #{_lambda_.1} parent=1 // pred_region
      _
    $region53: #{_lambda_.1} parent=1 // pred_fallthru
      _
    // Predicated region
    $region54: #{_lambda_.1} parent=1 // pred_check
      _
    $region55: #{_lambda_.1} parent=1 // pred_check_branch
      %49 = sbr.rel (0) target = $region57
    $region56: #{_lambda_.1} parent=1 // pred_region
      _
    $region57: #{_lambda_.1} parent=1 // pred_fallthru
      _
    // Predicated region
    $region58: #{_lambda_.1} parent=1 // pred_check
      _
    $region59: #{_lambda_.1} parent=1 // pred_check_branch
      %51 = sbr.rel (0) target = $region61
    $region60: #{_lambda_.1} parent=1 // pred_region
      _
    $region61: #{_lambda_.1} parent=1 // pred_fallthru
      _
    // Predicated region
    $region62: #{_lambda_.1} parent=1 // pred_check
      _
    $region63: #{_lambda_.1} parent=1 // pred_check_branch
      %53 = sbr.rel (0) target = $region65
    $region64: #{_lambda_.1} parent=1 // pred_region
      _
    $region65: #{_lambda_.1} parent=1 // pred_fallthru
      _
    %v55 = vld [vmem:[%s2] sm:$0xf]
    %v56 = vld [vmem:[%s2 + $0x4] sm:$0xf]
    %v57 = vld [vmem:[%s2 + $0x8] sm:$0xf]
    %v58 = vld [vmem:[%s2 + $0xc] sm:$0xf]
    %v59 = vld [vmem:[%s0] sm:$0xf]
    %v60 = vld [vmem:[%s0 + $0x4] sm:$0xf]
    %v61 = vld [vmem:[%s0 + $0x8] sm:$0xf]
    %v62 = vld [vmem:[%s0 + $0xc] sm:$0xf]
    %v63 = vld [vmem:[%s0 + $0x10] sm:$0xf]
    %v64 = vld [vmem:[%s0 + $0x14] sm:$0xf]
    %v65 = vld [vmem:[%s0 + $0x18] sm:$0xf]
    %v66 = vld [vmem:[%s0 + $0x1c] sm:$0xf]
    %v67 = vld [vmem:[%s3] sm:$0xff]
    %v68 = vld [vmem:[%s3 + $0x8] sm:$0xff]
    %v69 = vld [vmem:[%s3 + $0x10] sm:$0xff]
    %v70 = vld [vmem:[%s3 + $0x18] sm:$0xff]
    %72 = vset.pattern.permute.xlu0 0
    %73 = vperm.xlu0 %72, %v67
    %v74 = vpop.permute.xlu0 %73
    %77 = vset.pattern.permute.xlu0 0
    %78 = vperm.xlu0 %77, %v68
    %v79 = vpop.permute.xlu0 %78
    %82 = vset.pattern.permute.xlu0 0
    %83 = vperm.xlu0 %82, %v69
    %v84 = vpop.permute.xlu0 %83
    %87 = vset.pattern.permute.xlu0 0
    %88 = vperm.xlu0 %87, %v70
    %v89 = vpop.permute.xlu0 %88
    %v95 = vunpack.c.l.b16 %v55
    %v96 = vunpack.c.l.b16 %v56
    %v97 = vunpack.c.l.b16 %v57
    %v98 = vunpack.c.l.b16 %v58
    %v99 = vpack.c.b16 %v96, %v95
    %v100 = vpack.c.b16 %v98, %v97
    %v109 = vunpack.c.l.b16 %v59
    %v110 = vunpack.c.l.b16 %v60
    %v111 = vunpack.c.l.b16 %v61
    %v112 = vunpack.c.l.b16 %v62
    %v113 = vunpack.c.l.b16 %v63
    %v114 = vunpack.c.l.b16 %v64
    %v115 = vunpack.c.l.b16 %v65
    %v116 = vunpack.c.l.b16 %v66
    %v117 = vpack.c.b16 %v110, %v109
    %v118 = vpack.c.b16 %v112, %v111
    %v119 = vpack.c.b16 %v114, %v113
    %v120 = vpack.c.b16 %v116, %v115
    %vm125 = vcmask 523264
    %v127 = vsel %vm125, %v99, 0
    %v130 = vsel %vm125, %v100, 0
    %132 = vmatprep.subr.bf16.mxu0 0
    %133 = vmatpush1.bf16.msra.mxu0 %v117
    %134 = vmatprep.subr.bf16.mxu0 0
    %135 = vmatpush1.bf16.msra.mxu0 %v118
    %136 = vmatprep.subr.bf16.mxu0 0
    %137 = vmatpush1.bf16.msra.mxu0 %v119
    %138 = vmatprep.subr.bf16.mxu0 0
    %139 = vmatpush1.bf16.msra.mxu0 %v120
    %140 = vmatprep.subr.bf16.mxu0 0
    %141 = vmatpush1.bf16.msra.mxu0 0
    %142 = vmatprep.subr.bf16.mxu0 0
    %143 = vmatpush1.bf16.msra.mxu0 0
    %144 = vmatprep.subr.bf16.mxu0 0
    %145 = vmatpush1.bf16.msra.mxu0 0
    %146 = vmatprep.subr.bf16.mxu0 0
    %147 = vmatpush1.bf16.msra.mxu0 0
    %148 = vmatprep.subr.bf16.mxu0 0
    %149 = vmatpush1.bf16.msra.mxu0 0
    %150 = vmatprep.subr.bf16.mxu0 0
    %151 = vmatpush1.bf16.msra.mxu0 0
    %152 = vmatprep.subr.bf16.mxu0 0
    %153 = vmatpush1.bf16.msra.mxu0 0
    %154 = vmatprep.subr.bf16.mxu0 0
    %155 = vmatpush1.bf16.msra.mxu0 0
    %156 = vmatprep.subr.bf16.mxu0 0
    %157 = vmatpush1.bf16.msra.mxu0 0
    %158 = vmatprep.subr.bf16.mxu0 0
    %159 = vmatpush1.bf16.msra.mxu0 0
    %160 = vmatprep.subr.bf16.mxu0 0
    %161 = vmatpush1.bf16.msra.mxu0 0
    %162 = vmatprep.subr.bf16.mxu0 0
    %163 = vmatpush1.bf16.msra.mxu0 0
    %164 = vmatprep.mubr.bf16.mxu0 0
    %165 = vmatmul.mubr.bf16.gmra.mrb[0].mxu0 %v127
    %v166 = vpop.f32.mrb[0].mxu0
    %v167 = vadd.f32 %v74, %v166
    %v168 = vpop.f32.mrb[0].mxu0
    %v169 = vpop.f32.mrb[0].mxu0
    %v170 = vadd.f32 %v79, %v169
    %v171 = vpop.f32.mrb[0].mxu0
    %172 = vmatprep.mubr.bf16.mxu0 0
    %173 = vmatmul.mubr.bf16.gmra.mrb[0].mxu0 %v130
    %v174 = vpop.f32.mrb[0].mxu0
    %v175 = vadd.f32 %v84, %v174
    %v176 = vpop.f32.mrb[0].mxu0
    %v177 = vpop.f32.mrb[0].mxu0
    %v178 = vadd.f32 %v89, %v177
    %v179 = vpop.f32.mrb[0].mxu0
    %180 = vdwg.mxu0
    %v181 = vld [vmem:[%s1] sm:$0x1]
    %v182 = vsub.f32 1.0, %v181
    %v184 = vlaneseq
    %v185 = vshrl.u32 %v184, 7
    %v186 = vsub.s32 0, %v185
    %v187 = vrot.slane %v182, %v186
    %v189 = vmul.f32 %v167, %v187
    %v190 = vmul.f32 %v170, %v187
    %v191 = vmul.f32 %v175, %v187
    %v192 = vmul.f32 %v178, %v187
    %v193 = vld [vmem:[%s4] sm:$0xff]
    %v194 = vld [vmem:[%s4 + $0x8] sm:$0xff]
    %v195 = vld [vmem:[%s4 + $0x10] sm:$0xff]
    %v196 = vld [vmem:[%s4 + $0x18] sm:$0xff]
    %198 = vset.pattern.permute.xlu0 0
    %199 = vperm.xlu0 %198, %v193
    %v200 = vpop.permute.xlu0 %199
    %203 = vset.pattern.permute.xlu0 0
    %204 = vperm.xlu0 %203, %v194
    %v205 = vpop.permute.xlu0 %204
    %208 = vset.pattern.permute.xlu0 0
    %209 = vperm.xlu0 %208, %v195
    %v210 = vpop.permute.xlu0 %209
    %213 = vset.pattern.permute.xlu0 0
    %214 = vperm.xlu0 %213, %v196
    %v215 = vpop.permute.xlu0 %214
    %v218 = vlaneseq
    %v219 = vshrl.u32 %v218, 7
    %v220 = vsub.s32 0, %v219
    %v221 = vrot.slane %v181, %v220
    %v223 = vmul.f32 %v200, %v221
    %v224 = vmul.f32 %v205, %v221
    %v225 = vmul.f32 %v210, %v221
    %v226 = vmul.f32 %v215, %v221
    %v227 = vadd.f32 %v189, %v223
    %v228 = vadd.f32 %v190, %v224
    %v229 = vadd.f32 %v191, %v225
    %v230 = vadd.f32 %v192, %v226
    %v231 = vpack.c.bf16 %v228, %v227
    %v232 = vpack.c.bf16 %v230, %v229
    %v233 = vld [vmem:[%s9] sm:$0x3]
    %vm234 = vcmask 785408
    %v236 = vsel %vm234, %v233, 0
    %v239 = vsel %vm234, %v231, 0
    %v242 = vsel %vm234, %v232, 0
    %244 = vmatprep.subr.bf16.mxu0 0
    %245 = vmatpush1.bf16.xpose.msra.mxu0 %v239
    %246 = vmatprep.subr.bf16.mxu0 0
    %247 = vmatpush1.bf16.xpose.msra.mxu0 %v242
    %248 = vmatprep.subr.bf16.mxu0 0
    %249 = vmatpush1.bf16.xpose.msra.mxu0 0
    %250 = vmatprep.subr.bf16.mxu0 0
    %251 = vmatpush1.bf16.xpose.msra.mxu0 0
    %252 = vmatprep.subr.bf16.mxu0 0
    %253 = vmatpush1.bf16.xpose.msra.mxu0 0
    %254 = vmatprep.subr.bf16.mxu0 0
    %255 = vmatpush1.bf16.xpose.msra.mxu0 0
    %256 = vmatprep.subr.bf16.mxu0 0
    %257 = vmatpush1.bf16.xpose.msra.mxu0 0
    %258 = vmatprep.subr.bf16.mxu0 0
    %259 = vmatpush1.bf16.xpose.msra.mxu0 0
    %260 = vmatprep.subr.bf16.mxu0 0
    %261 = vmatpush1.bf16.xpose.msra.mxu0 0
    %262 = vmatprep.subr.bf16.mxu0 0
    %263 = vmatpush1.bf16.xpose.msra.mxu0 0
    %264 = vmatprep.subr.bf16.mxu0 0
    %265 = vmatpush1.bf16.xpose.msra.mxu0 0
    %266 = vmatprep.subr.bf16.mxu0 0
    %267 = vmatpush1.bf16.xpose.msra.mxu0 0
    %268 = vmatprep.subr.bf16.mxu0 0
    %269 = vmatpush1.bf16.xpose.msra.mxu0 0
    %270 = vmatprep.subr.bf16.mxu0 0
    %271 = vmatpush1.bf16.xpose.msra.mxu0 0
    %272 = vmatprep.subr.bf16.mxu0 0
    %273 = vmatpush1.bf16.xpose.msra.mxu0 0
    %274 = vmatprep.subr.bf16.mxu0 0
    %275 = vmatpush1.bf16.xpose.msra.mxu0 0
    %276 = vmatprep.mubr.bf16.mxu0 0
    %277 = vmatmul.mubr.bf16.gmra.mrb[0].mxu0 %v236
    %v278 = vpop.f32.mrb[0].mxu0
    %v279 = vadd.f32 0.0, %v278
    %v280 = vpop.f32.mrb[0].mxu0
    %v281 = vpop.f32.mrb[0].mxu0
    %v282 = vpop.f32.mrb[0].mxu0
    %283 = vdwg.mxu0
    %v284 = vpack.c.bf16 %v279, %v279
    %v285 = vld [vmem:[%s5] sm:$0xf]
    %v286 = vld [vmem:[%s5 + $0x4] sm:$0xf]
    %v287 = vld [vmem:[%s5 + $0x8] sm:$0xf]
    %v288 = vld [vmem:[%s5 + $0xc] sm:$0xf]
    %v289 = vld [vmem:[%s6] sm:$0x1]
    %v291 = vlaneseq
    %v292 = vshrl.u32 %v291, 7
    %v293 = vsub.s32 0, %v292
    %v294 = vrot.slane %v289, %v293
    %v300 = vunpack.c.l.b16 %v285
    %v301 = vunpack.c.l.b16 %v286
    %v302 = vunpack.c.l.b16 %v287
    %v303 = vunpack.c.l.b16 %v288
    %v304 = vpack.c.b16 %v301, %v300
    %v305 = vpack.c.b16 %v303, %v302
    %vm308 = vcmask 261120
    %v310 = vsel %vm308, %v284, 0
    %312 = vmatprep.subr.bf16.mxu0 0
    %313 = vmatpush1.bf16.msra.mxu0 %v304
    %314 = vmatprep.subr.bf16.mxu0 0
    %315 = vmatpush1.bf16.msra.mxu0 %v305
    %316 = vmatprep.subr.bf16.mxu0 0
    %317 = vmatpush1.bf16.msra.mxu0 0
    %318 = vmatprep.subr.bf16.mxu0 0
    %319 = vmatpush1.bf16.msra.mxu0 0
    %320 = vmatprep.subr.bf16.mxu0 0
    %321 = vmatpush1.bf16.msra.mxu0 0
    %322 = vmatprep.subr.bf16.mxu0 0
    %323 = vmatpush1.bf16.msra.mxu0 0
    %324 = vmatprep.subr.bf16.mxu0 0
    %325 = vmatpush1.bf16.msra.mxu0 0
    %326 = vmatprep.subr.bf16.mxu0 0
    %327 = vmatpush1.bf16.msra.mxu0 0
    %328 = vmatprep.subr.bf16.mxu0 0
    %329 = vmatpush1.bf16.msra.mxu0 0
    %330 = vmatprep.subr.bf16.mxu0 0
    %331 = vmatpush1.bf16.msra.mxu0 0
    %332 = vmatprep.subr.bf16.mxu0 0
    %333 = vmatpush1.bf16.msra.mxu0 0
    %334 = vmatprep.subr.bf16.mxu0 0
    %335 = vmatpush1.bf16.msra.mxu0 0
    %336 = vmatprep.subr.bf16.mxu0 0
    %337 = vmatpush1.bf16.msra.mxu0 0
    %338 = vmatprep.subr.bf16.mxu0 0
    %339 = vmatpush1.bf16.msra.mxu0 0
    %340 = vmatprep.subr.bf16.mxu0 0
    %341 = vmatpush1.bf16.msra.mxu0 0
    %342 = vmatprep.subr.bf16.mxu0 0
    %343 = vmatpush1.bf16.msra.mxu0 0
    %344 = vmatprep.mubr.bf16.mxu0 0
    %345 = vmatmul.mubr.bf16.gmra.mrb[0].mxu0 %v310
    %v346 = vpop.f32.mrb[0].mxu0
    %v347 = vadd.f32 %v294, %v346
    %v348 = vpop.f32.mrb[0].mxu0
    %v349 = vpop.f32.mrb[0].mxu0
    %v350 = vpop.f32.mrb[0].mxu0
    %351 = vdwg.mxu0
    %v352 = vmul.f32 %v347, %v347
    %v353 = vmul.f32 %v347, %v352
    %v354 = vmul.f32 %v353, 0.044715
    %v355 = vadd.f32 %v347, %v354
    %v356 = vmul.f32 %v355, 0.7978846
    %v357 = vtanh.pop %v356
    %v358 = vadd.f32 %v357, 1.0
    %v359 = vmul.f32 %v358, 0.5
    %v360 = vmul.f32 %v347, %v359
    %v361 = vpack.c.bf16 %v360, %v360
    %v362 = vld [vmem:[%s7] sm:$0xf]
    %v363 = vld [vmem:[%s7 + $0x4] sm:$0xf]
    %v364 = vld [vmem:[%s7 + $0x8] sm:$0xf]
    %v365 = vld [vmem:[%s7 + $0xc] sm:$0xf]
    %v366 = vld [vmem:[%s8] sm:$0x1]
    %v368 = vlaneseq
    %v369 = vshrl.u32 %v368, 7
    %v370 = vsub.s32 0, %v369
    %v371 = vrot.slane %v366, %v370
    %v377 = vunpack.c.l.b16 %v362
    %v378 = vunpack.c.l.b16 %v363
    %v379 = vunpack.c.l.b16 %v364
    %v380 = vunpack.c.l.b16 %v365
    %v381 = vpack.c.b16 %v378, %v377
    %v382 = vpack.c.b16 %v380, %v379
    %v386 = vsel %vm308, %v361, 0
    %388 = vmatprep.subr.bf16.mxu0 0
    %389 = vmatpush1.bf16.msra.mxu0 %v381
    %390 = vmatprep.subr.bf16.mxu0 0
    %391 = vmatpush1.bf16.msra.mxu0 %v382
    %392 = vmatprep.subr.bf16.mxu0 0
    %393 = vmatpush1.bf16.msra.mxu0 0
    %394 = vmatprep.subr.bf16.mxu0 0
    %395 = vmatpush1.bf16.msra.mxu0 0
    %396 = vmatprep.subr.bf16.mxu0 0
    %397 = vmatpush1.bf16.msra.mxu0 0
    %398 = vmatprep.subr.bf16.mxu0 0
    %399 = vmatpush1.bf16.msra.mxu0 0
    %400 = vmatprep.subr.bf16.mxu0 0
    %401 = vmatpush1.bf16.msra.mxu0 0
    %402 = vmatprep.subr.bf16.mxu0 0
    %403 = vmatpush1.bf16.msra.mxu0 0
    %404 = vmatprep.subr.bf16.mxu0 0
    %405 = vmatpush1.bf16.msra.mxu0 0
    %406 = vmatprep.subr.bf16.mxu0 0
    %407 = vmatpush1.bf16.msra.mxu0 0
    %408 = vmatprep.subr.bf16.mxu0 0
    %409 = vmatpush1.bf16.msra.mxu0 0
    %410 = vmatprep.subr.bf16.mxu0 0
    %411 = vmatpush1.bf16.msra.mxu0 0
    %412 = vmatprep.subr.bf16.mxu0 0
    %413 = vmatpush1.bf16.msra.mxu0 0
    %414 = vmatprep.subr.bf16.mxu0 0
    %415 = vmatpush1.bf16.msra.mxu0 0
    %416 = vmatprep.subr.bf16.mxu0 0
    %417 = vmatpush1.bf16.msra.mxu0 0
    %418 = vmatprep.subr.bf16.mxu0 0
    %419 = vmatpush1.bf16.msra.mxu0 0
    %420 = vmatprep.mubr.bf16.mxu0 0
    %421 = vmatmul.mubr.bf16.gmra.mrb[0].mxu0 %v386
    %v422 = vpop.f32.mrb[0].mxu0
    %v423 = vadd.f32 %v371, %v422
    %v424 = vpop.f32.mrb[0].mxu0
    %v425 = vpop.f32.mrb[0].mxu0
    %v426 = vpop.f32.mrb[0].mxu0
    %427 = vdwg.mxu0
    %v428 = vmul.f32 %v423, %v423
    %vm429 = vcmask 257024
    %v430 = vsel %vm429, %v428, 0.0
    %431 = vadd.xlane.f32.xlu0 %v430
    %v432 = vpop.xlane.xlu0 %431
    %v433 = vmax.f32 %v432, 1e-24
    %v434 = vrsqrt.pop %v433
    %v435 = vmul.f32 %v423, %v434
    %v436 = vpack.c.bf16 %v435, %v435
    %v438 = vsel %vm308, %v436, 0
    %440 = vmatprep.subr.bf16.mxu0 0
    %441 = vmatpush1.bf16.xpose.msra.mxu0 %v438
    %442 = vmatprep.subr.bf16.mxu0 0
    %443 = vmatpush1.bf16.xpose.msra.mxu0 0
    %444 = vmatprep.subr.bf16.mxu0 0
    %445 = vmatpush1.bf16.xpose.msra.mxu0 0
    %446 = vmatprep.subr.bf16.mxu0 0
    %447 = vmatpush1.bf16.xpose.msra.mxu0 0
    %448 = vmatprep.subr.bf16.mxu0 0
    %449 = vmatpush1.bf16.xpose.msra.mxu0 0
    %450 = vmatprep.subr.bf16.mxu0 0
    %451 = vmatpush1.bf16.xpose.msra.mxu0 0
    %452 = vmatprep.subr.bf16.mxu0 0
    %453 = vmatpush1.bf16.xpose.msra.mxu0 0
    %454 = vmatprep.subr.bf16.mxu0 0
    %455 = vmatpush1.bf16.xpose.msra.mxu0 0
    %456 = vmatprep.subr.bf16.mxu0 0
    %457 = vmatpush1.bf16.xpose.msra.mxu0 0
    %458 = vmatprep.subr.bf16.mxu0 0
    %459 = vmatpush1.bf16.xpose.msra.mxu0 0
    %460 = vmatprep.subr.bf16.mxu0 0
    %461 = vmatpush1.bf16.xpose.msra.mxu0 0
    %462 = vmatprep.subr.bf16.mxu0 0
    %463 = vmatpush1.bf16.xpose.msra.mxu0 0
    %464 = vmatprep.subr.bf16.mxu0 0
    %465 = vmatpush1.bf16.xpose.msra.mxu0 0
    %466 = vmatprep.subr.bf16.mxu0 0
    %467 = vmatpush1.bf16.xpose.msra.mxu0 0
    %468 = vmatprep.subr.bf16.mxu0 0
    %469 = vmatpush1.bf16.xpose.msra.mxu0 0
    %470 = vmatprep.subr.bf16.mxu0 0
    %471 = vmatpush1.bf16.xpose.msra.mxu0 0
    %472 = vmatprep.mubr.bf16.mxu0 0
    %473 = vmatmul.mubr.bf16.gmra.mrb[0].mxu0 %v438
    %v474 = vpop.f32.mrb[0].mxu0
    %v475 = vadd.f32 0.0, %v474
    %v476 = vpop.f32.mrb[0].mxu0
    %v477 = vpop.f32.mrb[0].mxu0
    %v478 = vpop.f32.mrb[0].mxu0
    %479 = vdwg.mxu0
    %v480 = vlaneseq
    %v481 = vshrl.u32 %v480, 7
    %v482 = vlaneseq
    %v483 = vand.u32 %v482, 127
    %vm484 = vcmp.ge.s32.totalorder %v483, 2
    %v485 = vsel %vm484, %v475, -1e+30
    %vm486 = vcmask 27648
    %v487 = vsel %vm486, %v485, -inf
    %488 = vmax.xlane.f32.xlu0 %v487
    %v489 = vpop.xlane.xlu0 %488
    %v490 = vsub.f32 %v475, %v489
    %v491 = vmul.f32 %v490, 1.442695
    %v492 = vpow.pop %v491
    %v493 = vsel %vm484, %v492, 0.0
    %v494 = vsel %vm486, %v493, 0.0
    %495 = vadd.xlane.f32.xlu0 %v494
    %v496 = vpop.xlane.xlu0 %495
    %v497 = vlog2.pop %v496
    %v498 = vmul.f32 %v497, 0.6931472
    %v499 = vadd.f32 %v489, %v498
    %v500 = vadd.s32 %v481, 2
    %vm501 = vcmp.eq.s32.totalorder %v483, %v500
    %v502 = vsel %vm501, %v475, 0.0
    %v503 = vsel %vm486, %v502, 0.0
    %504 = vadd.xlane.f32.xlu0 %v503
    %v505 = vpop.xlane.xlu0 %504
    %vm506 = vcmp.lt.s32.totalorder %v481, 2
    %v507 = vsel %vm506, 1, 0
    %v508 = vcvt.s32.f32 %v507
    %v509 = vsub.f32 %v499, %v505
    %v510 = vmul.f32 %v509, %v508
    %vm511 = vcmask 1043456
    %v512 = vsel %vm511, %v510, 0.0
    %v513 = vrot.slane %v512, 4
    %v514 = vadd.f32 %v512, %v513
    %v515 = vrot.slane %v514, 2
    %v516 = vadd.f32 %v514, %v515
    %v517 = vrot.slane %v516, 1
    %v518 = vadd.f32 %v516, %v517
    %v519 = vmul.f32 %v518, 0.05
    %v520 = vld [vmem:[%s14] sm:$0x3]
    %v522 = vsel %vm308, %v520, 0
    %524 = vmatprep.subr.bf16.mxu0 0
    %525 = vmatpush1.bf16.msra.mxu0 %v231
    %526 = vmatprep.subr.bf16.mxu0 0
    %527 = vmatpush1.bf16.msra.mxu0 %v232
    %528 = vmatprep.subr.bf16.mxu0 0
    %529 = vmatpush1.bf16.msra.mxu0 0
    %530 = vmatprep.subr.bf16.mxu0 0
    %531 = vmatpush1.bf16.msra.mxu0 0
    %532 = vmatprep.subr.bf16.mxu0 0
    %533 = vmatpush1.bf16.msra.mxu0 0
    %534 = vmatprep.subr.bf16.mxu0 0
    %535 = vmatpush1.bf16.msra.mxu0 0
    %536 = vmatprep.subr.bf16.mxu0 0
    %537 = vmatpush1.bf16.msra.mxu0 0
    %538 = vmatprep.subr.bf16.mxu0 0
    %539 = vmatpush1.bf16.msra.mxu0 0
    %540 = vmatprep.subr.bf16.mxu0 0
    %541 = vmatpush1.bf16.msra.mxu0 0
    %542 = vmatprep.subr.bf16.mxu0 0
    %543 = vmatpush1.bf16.msra.mxu0 0
    %544 = vmatprep.subr.bf16.mxu0 0
    %545 = vmatpush1.bf16.msra.mxu0 0
    %546 = vmatprep.subr.bf16.mxu0 0
    %547 = vmatpush1.bf16.msra.mxu0 0
    %548 = vmatprep.subr.bf16.mxu0 0
    %549 = vmatpush1.bf16.msra.mxu0 0
    %550 = vmatprep.subr.bf16.mxu0 0
    %551 = vmatpush1.bf16.msra.mxu0 0
    %552 = vmatprep.subr.bf16.mxu0 0
    %553 = vmatpush1.bf16.msra.mxu0 0
    %554 = vmatprep.subr.bf16.mxu0 0
    %555 = vmatpush1.bf16.msra.mxu0 0
    %556 = vmatprep.mubr.bf16.mxu0 0
    %557 = vmatmul.mubr.bf16.gmra.mrb[0].mxu0 %v522
    %v558 = vpop.f32.mrb[0].mxu0
    %v559 = vadd.f32 0.0, %v558
    %v560 = vpop.f32.mrb[0].mxu0
    %v561 = vpop.f32.mrb[0].mxu0
    %v562 = vpop.f32.mrb[0].mxu0
    %563 = vdwg.mxu0
    %v564 = vpack.c.bf16 %v559, %v559
    %v565 = vld [vmem:[%s12] sm:$0xff]
    %v566 = vld [vmem:[%s12 + $0x8] sm:$0xff]
    %v567 = vld [vmem:[%s12 + $0x10] sm:$0xff]
    %v568 = vld [vmem:[%s12 + $0x18] sm:$0xff]
    %v569 = vld [vmem:[%s12 + $0x20] sm:$0xff]
    %v570 = vld [vmem:[%s12 + $0x28] sm:$0xff]
    %v571 = vld [vmem:[%s12 + $0x30] sm:$0xff]
    %v572 = vld [vmem:[%s12 + $0x38] sm:$0xff]
    %v573 = vld [vmem:[%s12 + $0x40] sm:$0xff]
    %v574 = vld [vmem:[%s12 + $0x48] sm:$0xff]
    %v575 = vld [vmem:[%s12 + $0x50] sm:$0xff]
    %v576 = vld [vmem:[%s12 + $0x58] sm:$0xff]
    %v577 = vld [vmem:[%s12 + $0x60] sm:$0xff]
    %v578 = vld [vmem:[%s12 + $0x68] sm:$0xff]
    %v579 = vld [vmem:[%s12 + $0x70] sm:$0xff]
    %v580 = vld [vmem:[%s12 + $0x78] sm:$0xff]
    %v581 = vld [vmem:[%s12 + $0x80] sm:$0xff]
    %v582 = vld [vmem:[%s12 + $0x88] sm:$0xff]
    %v583 = vld [vmem:[%s12 + $0x90] sm:$0xff]
    %v584 = vld [vmem:[%s12 + $0x98] sm:$0xff]
    %v585 = vld [vmem:[%s12 + $0xa0] sm:$0xff]
    %v586 = vld [vmem:[%s12 + $0xa8] sm:$0xff]
    %v587 = vld [vmem:[%s12 + $0xb0] sm:$0xff]
    %v588 = vld [vmem:[%s12 + $0xb8] sm:$0xff]
    %v613 = vunpack.c.l.b16 %v565
    %v614 = vunpack.c.h.b16 %v565
    %v615 = vunpack.c.l.b16 %v566
    %v616 = vunpack.c.h.b16 %v566
    %v617 = vunpack.c.l.b16 %v567
    %v618 = vunpack.c.h.b16 %v567
    %v619 = vunpack.c.l.b16 %v568
    %v620 = vunpack.c.h.b16 %v568
    %v621 = vunpack.c.l.b16 %v569
    %v622 = vunpack.c.h.b16 %v569
    %v623 = vunpack.c.l.b16 %v570
    %v624 = vunpack.c.h.b16 %v570
    %v625 = vunpack.c.l.b16 %v571
    %v626 = vunpack.c.h.b16 %v571
    %v627 = vunpack.c.l.b16 %v572
    %v628 = vunpack.c.h.b16 %v572
    %v629 = vunpack.c.l.b16 %v573
    %v630 = vunpack.c.h.b16 %v573
    %v631 = vunpack.c.l.b16 %v574
    %v632 = vunpack.c.h.b16 %v574
    %v633 = vunpack.c.l.b16 %v575
    %v634 = vunpack.c.h.b16 %v575
    %v635 = vunpack.c.l.b16 %v576
    %v636 = vunpack.c.h.b16 %v576
    %v637 = vunpack.c.l.b16 %v577
    %v638 = vunpack.c.h.b16 %v577
    %v639 = vunpack.c.l.b16 %v578
    %v640 = vunpack.c.h.b16 %v578
    %v641 = vunpack.c.l.b16 %v579
    %v642 = vunpack.c.h.b16 %v579
    %v643 = vunpack.c.l.b16 %v580
    %v644 = vunpack.c.h.b16 %v580
    %v645 = vunpack.c.l.b16 %v581
    %v646 = vunpack.c.h.b16 %v581
    %v647 = vunpack.c.l.b16 %v582
    %v648 = vunpack.c.h.b16 %v582
    %v649 = vunpack.c.l.b16 %v583
    %v650 = vunpack.c.h.b16 %v583
    %v651 = vunpack.c.l.b16 %v584
    %v652 = vunpack.c.h.b16 %v584
    %v653 = vunpack.c.l.b16 %v585
    %v654 = vunpack.c.h.b16 %v585
    %v655 = vunpack.c.l.b16 %v586
    %v656 = vunpack.c.h.b16 %v586
    %v657 = vunpack.c.l.b16 %v587
    %v658 = vunpack.c.h.b16 %v587
    %v659 = vunpack.c.l.b16 %v588
    %v660 = vunpack.c.h.b16 %v588
    %v661 = vpack.c.b16 %v617, %v613
    %v662 = vpack.c.b16 %v618, %v614
    %v663 = vpack.c.b16 %v619, %v615
    %v664 = vpack.c.b16 %v620, %v616
    %v665 = vpack.c.b16 %v625, %v621
    %v666 = vpack.c.b16 %v626, %v622
    %v667 = vpack.c.b16 %v627, %v623
    %v668 = vpack.c.b16 %v628, %v624
    %v669 = vpack.c.b16 %v633, %v629
    %v670 = vpack.c.b16 %v634, %v630
    %v671 = vpack.c.b16 %v635, %v631
    %v672 = vpack.c.b16 %v636, %v632
    %v673 = vpack.c.b16 %v641, %v637
    %v674 = vpack.c.b16 %v642, %v638
    %v675 = vpack.c.b16 %v643, %v639
    %v676 = vpack.c.b16 %v644, %v640
    %v677 = vpack.c.b16 %v649, %v645
    %v678 = vpack.c.b16 %v650, %v646
    %v679 = vpack.c.b16 %v651, %v647
    %v680 = vpack.c.b16 %v652, %v648
    %v681 = vpack.c.b16 %v657, %v653
    %v682 = vpack.c.b16 %v658, %v654
    %v683 = vpack.c.b16 %v659, %v655
    %v684 = vpack.c.b16 %v660, %v656
    %v710 = vsel %vm234, %v564, 0
    %712 = vmatprep.subr.bf16.mxu0 %v662
    %713 = vmatpush1.bf16.msra.mxu0 %v661
    %714 = vmatprep.subr.bf16.mxu0 %v666
    %715 = vmatpush1.bf16.msra.mxu0 %v665
    %716 = vmatprep.subr.bf16.mxu0 %v670
    %717 = vmatpush1.bf16.msra.mxu0 %v669
    %718 = vmatprep.subr.bf16.mxu0 %v674
    %719 = vmatpush1.bf16.msra.mxu0 %v673
    %720 = vmatprep.subr.bf16.mxu0 %v678
    %721 = vmatpush1.bf16.msra.mxu0 %v677
    %722 = vmatprep.subr.bf16.mxu0 %v682
    %723 = vmatpush1.bf16.msra.mxu0 %v681
    %724 = vmatprep.subr.bf16.mxu0 0
    %725 = vmatpush1.bf16.msra.mxu0 0
    %726 = vmatprep.subr.bf16.mxu0 0
    %727 = vmatpush1.bf16.msra.mxu0 0
    %728 = vmatprep.subr.bf16.mxu0 0
    %729 = vmatpush1.bf16.msra.mxu0 0
    %730 = vmatprep.subr.bf16.mxu0 0
    %731 = vmatpush1.bf16.msra.mxu0 0
    %732 = vmatprep.subr.bf16.mxu0 0
    %733 = vmatpush1.bf16.msra.mxu0 0
    %734 = vmatprep.subr.bf16.mxu0 0
    %735 = vmatpush1.bf16.msra.mxu0 0
    %736 = vmatprep.subr.bf16.mxu0 0
    %737 = vmatpush1.bf16.msra.mxu0 0
    %738 = vmatprep.subr.bf16.mxu0 0
    %739 = vmatpush1.bf16.msra.mxu0 0
    %740 = vmatprep.subr.bf16.mxu0 0
    %741 = vmatpush1.bf16.msra.mxu0 0
    %742 = vmatprep.subr.bf16.mxu0 0
    %743 = vmatpush1.bf16.msra.mxu0 0
    %744 = vmatprep.mubr.bf16.mxu0 0
    %745 = vmatmul.mubr.bf16.gmra.mrb[0].mxu0 %v710
    %v746 = vpop.f32.mrb[0].mxu0
    %v747 = vadd.f32 0.0, %v746
    %v748 = vpop.f32.mrb[0].mxu0
    %v749 = vadd.f32 0.0, %v748
    %v750 = vpop.f32.mrb[0].mxu0
    %v751 = vpop.f32.mrb[0].mxu0
    %752 = vdwg.mxu0
    %753 = vmatprep.subr.bf16.mxu0 %v664
    %754 = vmatpush1.bf16.msra.mxu0 %v663
    %755 = vmatprep.subr.bf16.mxu0 %v668
    %756 = vmatpush1.bf16.msra.mxu0 %v667
    %757 = vmatprep.subr.bf16.mxu0 %v672
    %758 = vmatpush1.bf16.msra.mxu0 %v671
    %759 = vmatprep.subr.bf16.mxu0 %v676
    %760 = vmatpush1.bf16.msra.mxu0 %v675
    %761 = vmatprep.subr.bf16.mxu0 %v680
    %762 = vmatpush1.bf16.msra.mxu0 %v679
    %763 = vmatprep.subr.bf16.mxu0 %v684
    %764 = vmatpush1.bf16.msra.mxu0 %v683
    %765 = vmatprep.subr.bf16.mxu0 0
    %766 = vmatpush1.bf16.msra.mxu0 0
    %767 = vmatprep.subr.bf16.mxu0 0
    %768 = vmatpush1.bf16.msra.mxu0 0
    %769 = vmatprep.subr.bf16.mxu0 0
    %770 = vmatpush1.bf16.msra.mxu0 0
    %771 = vmatprep.subr.bf16.mxu0 0
    %772 = vmatpush1.bf16.msra.mxu0 0
    %773 = vmatprep.subr.bf16.mxu0 0
    %774 = vmatpush1.bf16.msra.mxu0 0
    %775 = vmatprep.subr.bf16.mxu0 0
    %776 = vmatpush1.bf16.msra.mxu0 0
    %777 = vmatprep.subr.bf16.mxu0 0
    %778 = vmatpush1.bf16.msra.mxu0 0
    %779 = vmatprep.subr.bf16.mxu0 0
    %780 = vmatpush1.bf16.msra.mxu0 0
    %781 = vmatprep.subr.bf16.mxu0 0
    %782 = vmatpush1.bf16.msra.mxu0 0
    %783 = vmatprep.subr.bf16.mxu0 0
    %784 = vmatpush1.bf16.msra.mxu0 0
    %785 = vmatprep.mubr.bf16.mxu0 0
    %786 = vmatmul.mubr.bf16.gmra.mrb[0].mxu0 %v710
    %v787 = vpop.f32.mrb[0].mxu0
    %v788 = vadd.f32 0.0, %v787
    %v789 = vpop.f32.mrb[0].mxu0
    %v790 = vadd.f32 0.0, %v789
    %v791 = vpop.f32.mrb[0].mxu0
    %v792 = vpop.f32.mrb[0].mxu0
    %793 = vdwg.mxu0
    %v794 = vpack.c.bf16 %v181, %v181
    %v796 = vsel %vm234, %v794, 0
    %798 = vmatprep.subr.bf16.mxu0 %v662
    %799 = vmatpush1.bf16.msra.mxu0 %v661
    %800 = vmatprep.subr.bf16.mxu0 %v666
    %801 = vmatpush1.bf16.msra.mxu0 %v665
    %802 = vmatprep.subr.bf16.mxu0 %v670
    %803 = vmatpush1.bf16.msra.mxu0 %v669
    %804 = vmatprep.subr.bf16.mxu0 %v674
    %805 = vmatpush1.bf16.msra.mxu0 %v673
    %806 = vmatprep.subr.bf16.mxu0 %v678
    %807 = vmatpush1.bf16.msra.mxu0 %v677
    %808 = vmatprep.subr.bf16.mxu0 %v682
    %809 = vmatpush1.bf16.msra.mxu0 %v681
    %810 = vmatprep.subr.bf16.mxu0 0
    %811 = vmatpush1.bf16.msra.mxu0 0
    %812 = vmatprep.subr.bf16.mxu0 0
    %813 = vmatpush1.bf16.msra.mxu0 0
    %814 = vmatprep.subr.bf16.mxu0 0
    %815 = vmatpush1.bf16.msra.mxu0 0
    %816 = vmatprep.subr.bf16.mxu0 0
    %817 = vmatpush1.bf16.msra.mxu0 0
    %818 = vmatprep.subr.bf16.mxu0 0
    %819 = vmatpush1.bf16.msra.mxu0 0
    %820 = vmatprep.subr.bf16.mxu0 0
    %821 = vmatpush1.bf16.msra.mxu0 0
    %822 = vmatprep.subr.bf16.mxu0 0
    %823 = vmatpush1.bf16.msra.mxu0 0
    %824 = vmatprep.subr.bf16.mxu0 0
    %825 = vmatpush1.bf16.msra.mxu0 0
    %826 = vmatprep.subr.bf16.mxu0 0
    %827 = vmatpush1.bf16.msra.mxu0 0
    %828 = vmatprep.subr.bf16.mxu0 0
    %829 = vmatpush1.bf16.msra.mxu0 0
    %830 = vmatprep.mubr.bf16.mxu0 0
    %831 = vmatmul.mubr.bf16.gmra.mrb[0].mxu0 %v796
    %v832 = vpop.f32.mrb[0].mxu0
    %v833 = vadd.f32 0.0, %v832
    %v834 = vpop.f32.mrb[0].mxu0
    %v835 = vadd.f32 0.0, %v834
    %v836 = vpop.f32.mrb[0].mxu0
    %v837 = vpop.f32.mrb[0].mxu0
    %838 = vdwg.mxu0
    %839 = vmatprep.subr.bf16.mxu0 %v664
    %840 = vmatpush1.bf16.msra.mxu0 %v663
    %841 = vmatprep.subr.bf16.mxu0 %v668
    %842 = vmatpush1.bf16.msra.mxu0 %v667
    %843 = vmatprep.subr.bf16.mxu0 %v672
    %844 = vmatpush1.bf16.msra.mxu0 %v671
    %845 = vmatprep.subr.bf16.mxu0 %v676
    %846 = vmatpush1.bf16.msra.mxu0 %v675
    %847 = vmatprep.subr.bf16.mxu0 %v680
    %848 = vmatpush1.bf16.msra.mxu0 %v679
    %849 = vmatprep.subr.bf16.mxu0 %v684
    %850 = vmatpush1.bf16.msra.mxu0 %v683
    %851 = vmatprep.subr.bf16.mxu0 0
    %852 = vmatpush1.bf16.msra.mxu0 0
    %853 = vmatprep.subr.bf16.mxu0 0
    %854 = vmatpush1.bf16.msra.mxu0 0
    %855 = vmatprep.subr.bf16.mxu0 0
    %856 = vmatpush1.bf16.msra.mxu0 0
    %857 = vmatprep.subr.bf16.mxu0 0
    %858 = vmatpush1.bf16.msra.mxu0 0
    %859 = vmatprep.subr.bf16.mxu0 0
    %860 = vmatpush1.bf16.msra.mxu0 0
    %861 = vmatprep.subr.bf16.mxu0 0
    %862 = vmatpush1.bf16.msra.mxu0 0
    %863 = vmatprep.subr.bf16.mxu0 0
    %864 = vmatpush1.bf16.msra.mxu0 0
    %865 = vmatprep.subr.bf16.mxu0 0
    %866 = vmatpush1.bf16.msra.mxu0 0
    %867 = vmatprep.subr.bf16.mxu0 0
    %868 = vmatpush1.bf16.msra.mxu0 0
    %869 = vmatprep.subr.bf16.mxu0 0
    %870 = vmatpush1.bf16.msra.mxu0 0
    %871 = vmatprep.mubr.bf16.mxu0 0
    %872 = vmatmul.mubr.bf16.gmra.mrb[0].mxu0 %v796
    %v873 = vpop.f32.mrb[0].mxu0
    %v874 = vadd.f32 0.0, %v873
    %v875 = vpop.f32.mrb[0].mxu0
    %v876 = vadd.f32 0.0, %v875
    %v877 = vpop.f32.mrb[0].mxu0
    %v878 = vpop.f32.mrb[0].mxu0
    %879 = vdwg.mxu0
    %v880 = vld [vmem:[%s13] sm:$0x3]
    %v881 = vld [vmem:[%s10] sm:$0xff]
    %v883 = vcombine.high %v881, %v881
    %v885 = vunpack.c.l.s4 1983009808
    %v886 = vunpack.c.0.s8 %v885
    %v887 = vlaneseq
    %v888 = vshrl.u32 %v887, 7
    %v889 = vsub.s32 %v886, %v888
    %v890 = vrot.slane %v881, %v889
    %v892 = vunpack.c.l.s4 1983009808
    %v893 = vunpack.c.0.s8 %v892
    %v894 = vlaneseq
    %v895 = vshrl.u32 %v894, 7
    %v896 = vsub.s32 %v893, %v895
    %v897 = vrot.slane %v883, %v896
    %v898 = vcombine.high %v890, %v890
    %v899 = vcombine.high %v897, %v897
    %vm900 = vcmask 31744
    %v902 = vsel %vm900, %v880, 0
    %vm904 = vcmask 1041408
    %v906 = vsel %vm904, %v890, 0
    %v909 = vsel %vm904, %v898, 0
    %v912 = vsel %vm904, %v897, 0
    %v915 = vsel %vm904, %v899, 0
    %917 = vmatprep.subr.bf16.mxu0 %v909
    %918 = vmatpush1.bf16.msra.mxu0 %v906
    %919 = vmatprep.subr.bf16.mxu0 0
    %920 = vmatpush1.bf16.msra.mxu0 0
    %921 = vmatprep.subr.bf16.mxu0 0
    %922 = vmatpush1.bf16.msra.mxu0 0
    %923 = vmatprep.subr.bf16.mxu0 0
    %924 = vmatpush1.bf16.msra.mxu0 0
    %925 = vmatprep.subr.bf16.mxu0 0
    %926 = vmatpush1.bf16.msra.mxu0 0
    %927 = vmatprep.subr.bf16.mxu0 0
    %928 = vmatpush1.bf16.msra.mxu0 0
    %929 = vmatprep.subr.bf16.mxu0 0
    %930 = vmatpush1.bf16.msra.mxu0 0
    %931 = vmatprep.subr.bf16.mxu0 0
    %932 = vmatpush1.bf16.msra.mxu0 0
    %933 = vmatprep.subr.bf16.mxu0 0
    %934 = vmatpush1.bf16.msra.mxu0 0
    %935 = vmatprep.subr.bf16.mxu0 0
    %936 = vmatpush1.bf16.msra.mxu0 0
    %937 = vmatprep.subr.bf16.mxu0 0
    %938 = vmatpush1.bf16.msra.mxu0 0
    %939 = vmatprep.subr.bf16.mxu0 0
    %940 = vmatpush1.bf16.msra.mxu0 0
    %941 = vmatprep.subr.bf16.mxu0 0
    %942 = vmatpush1.bf16.msra.mxu0 0
    %943 = vmatprep.subr.bf16.mxu0 0
    %944 = vmatpush1.bf16.msra.mxu0 0
    %945 = vmatprep.subr.bf16.mxu0 0
    %946 = vmatpush1.bf16.msra.mxu0 0
    %947 = vmatprep.subr.bf16.mxu0 0
    %948 = vmatpush1.bf16.msra.mxu0 0
    %949 = vmatprep.mubr.bf16.mxu0 0
    %950 = vmatmul.mubr.bf16.gmra.mrb[0].mxu0 %v902
    %v951 = vpop.f32.mrb[0].mxu0
    %v952 = vadd.f32 %v747, %v951
    %v953 = vpop.f32.mrb[0].mxu0
    %v954 = vadd.f32 %v749, %v953
    %v955 = vpop.f32.mrb[0].mxu0
    %v956 = vpop.f32.mrb[0].mxu0
    %957 = vdwg.mxu0
    %958 = vmatprep.subr.bf16.mxu0 %v915
    %959 = vmatpush1.bf16.msra.mxu0 %v912
    %960 = vmatprep.subr.bf16.mxu0 0
    %961 = vmatpush1.bf16.msra.mxu0 0
    %962 = vmatprep.subr.bf16.mxu0 0
    %963 = vmatpush1.bf16.msra.mxu0 0
    %964 = vmatprep.subr.bf16.mxu0 0
    %965 = vmatpush1.bf16.msra.mxu0 0
    %966 = vmatprep.subr.bf16.mxu0 0
    %967 = vmatpush1.bf16.msra.mxu0 0
    %968 = vmatprep.subr.bf16.mxu0 0
    %969 = vmatpush1.bf16.msra.mxu0 0
    %970 = vmatprep.subr.bf16.mxu0 0
    %971 = vmatpush1.bf16.msra.mxu0 0
    %972 = vmatprep.subr.bf16.mxu0 0
    %973 = vmatpush1.bf16.msra.mxu0 0
    %974 = vmatprep.subr.bf16.mxu0 0
    %975 = vmatpush1.bf16.msra.mxu0 0
    %976 = vmatprep.subr.bf16.mxu0 0
    %977 = vmatpush1.bf16.msra.mxu0 0
    %978 = vmatprep.subr.bf16.mxu0 0
    %979 = vmatpush1.bf16.msra.mxu0 0
    %980 = vmatprep.subr.bf16.mxu0 0
    %981 = vmatpush1.bf16.msra.mxu0 0
    %982 = vmatprep.subr.bf16.mxu0 0
    %983 = vmatpush1.bf16.msra.mxu0 0
    %984 = vmatprep.subr.bf16.mxu0 0
    %985 = vmatpush1.bf16.msra.mxu0 0
    %986 = vmatprep.subr.bf16.mxu0 0
    %987 = vmatpush1.bf16.msra.mxu0 0
    %988 = vmatprep.subr.bf16.mxu0 0
    %989 = vmatpush1.bf16.msra.mxu0 0
    %990 = vmatprep.mubr.bf16.mxu0 0
    %991 = vmatmul.mubr.bf16.gmra.mrb[0].mxu0 %v902
    %v992 = vpop.f32.mrb[0].mxu0
    %v993 = vadd.f32 %v788, %v992
    %v994 = vpop.f32.mrb[0].mxu0
    %v995 = vadd.f32 %v790, %v994
    %v996 = vpop.f32.mrb[0].mxu0
    %v997 = vpop.f32.mrb[0].mxu0
    %998 = vdwg.mxu0
    %v999 = vld [vmem:[%s15] sm:$0xf]
    %1001 = vset.pattern.permute.xlu0 0
    %1002 = vperm.xlu0 %1001, %v999
    %v1003 = vpop.permute.xlu0 %1002
    %v1005 = vadd.f32 %v952, %v1003
    %v1006 = vadd.f32 %v954, %v1003
    %v1007 = vadd.f32 %v993, %v1003
    %v1008 = vadd.f32 %v995, %v1003
    %v1009 = vld [vmem:[%s11] sm:$0xff]
    %v1010 = vld [vmem:[%s11 + $0x8] sm:$0xff]
    %v1013 = vcombine.high %v1009, %v1009
    %v1014 = vcombine.high %v1010, %v1010
    %v1017 = vsub.f32 %v1005, %v1009
    %v1018 = vsub.f32 %v1006, %v1013
    %v1019 = vsub.f32 %v1007, %v1010
    %v1020 = vsub.f32 %v1008, %v1014
    %v1021 = vmul.f32 %v1017, %v1017
    %v1022 = vmul.f32 %v1018, %v1018
    %v1023 = vmul.f32 %v1019, %v1019
    %v1024 = vmul.f32 %v1020, %v1020
    %v1025 = vlaneseq
    %v1026 = vshrl.u32 %v1025, 7
    %v1027 = vsub.s32 0, %v1026
    %v1028 = vrot.slane %v833, %v1027
    %v1029 = vlaneseq
    %v1030 = vshrl.u32 %v1029, 7
    %v1031 = vsub.s32 0, %v1030
    %v1032 = vrot.slane %v835, %v1031
    %v1033 = vlaneseq
    %v1034 = vshrl.u32 %v1033, 7
    %v1035 = vsub.s32 0, %v1034
    %v1036 = vrot.slane %v874, %v1035
    %v1037 = vlaneseq
    %v1038 = vshrl.u32 %v1037, 7
    %v1039 = vsub.s32 0, %v1038
    %v1040 = vrot.slane %v876, %v1039
    %v1041 = vmul.f32 %v1021, %v1028
    %v1042 = vmul.f32 %v1022, %v1032
    %v1043 = vmul.f32 %v1023, %v1036
    %v1044 = vmul.f32 %v1024, %v1040
    %v1045 = vsel %vm511, %v1041, 0.0
    %v1046 = vsel %vm511, %v1042, 0.0
    %v1047 = vadd.f32 %v1045, %v1046
    %v1048 = vsel %vm511, %v1043, 0.0
    %v1049 = vadd.f32 %v1047, %v1048
    %v1050 = vsel %vm511, %v1044, 0.0
    %v1051 = vadd.f32 %v1049, %v1050
    %1052 = vadd.xlane.f32.xlu0 %v1051
    %v1053 = vpop.xlane.xlu0 %1052
    %v1054 = vrot.slane %v1053, 4
    %v1055 = vadd.f32 %v1053, %v1054
    %v1056 = vrot.slane %v1055, 2
    %v1057 = vadd.f32 %v1055, %v1056
    %v1058 = vrot.slane %v1057, 1
    %v1059 = vadd.f32 %v1057, %v1058
    %s1060 = vtos %v1059
    %v1061 = vstv %s1060
    %vm1062 = vcmask 1040384
    %v1063 = vsel %vm1062, %v833, 0.0
    %v1064 = vsel %vm1062, %v835, 0.0
    %v1065 = vadd.f32 %v1063, %v1064
    %v1066 = vsel %vm1062, %v874, 0.0
    %v1067 = vadd.f32 %v1065, %v1066
    %v1068 = vsel %vm1062, %v876, 0.0
    %v1069 = vadd.f32 %v1067, %v1068
    %1070 = vadd.xlane.f32.xlu0 %v1069
    %v1071 = vpop.xlane.xlu0 %1070
    %v1072 = vrot.slane %v1071, 4
    %v1073 = vadd.f32 %v1071, %v1072
    %v1074 = vrot.slane %v1073, 2
    %v1075 = vadd.f32 %v1073, %v1074
    %v1076 = vrot.slane %v1075, 1
    %v1077 = vadd.f32 %v1075, %v1076
    %s1078 = vtos %v1077
    %v1079 = vstv %s1078
    %v1080 = vmul.f32 %v1079, 4.0
    %v1081 = vmax.f32 %v1080, 1.0
    %v1082 = vrcp.pop %v1081
    %v1083 = vmul.f32 %v1061, %v1082
    %v1084 = vadd.f32 %v1083, %v519
    %vm1085 = vcmask 0
    %1086 = vst.msk [vmem:[#allocation2] sm:$0x1] %vm1085, %v1084
    // Predicated region
    $region66: #{_lambda_.1} parent=1 // pred_check
      _
    $region67: #{_lambda_.1} parent=1 // pred_check_branch
      %1088 = sbr.rel (0) target = $region69
    $region68: #{_lambda_.1} parent=1 // pred_region
      %s1090 = ssub.s32 16, 16
      %1091 = vsyncadd [#allocation3], %s1090
      %s1093 = sshll.u32 [#allocation2], 4
      %s1094 = int_to_ptr.vmem [resolvable:$true] %s1093
      %1096 = dma.vmem_to_hbm [thread:$0]  %s1094, 16, %s16, [#allocation3]
    $region69: #{_lambda_.1} parent=1 // pred_fallthru
      _
    // Predicated region
    $region70: #{_lambda_.1} parent=1 // pred_check
      _
    $region71: #{_lambda_.1} parent=1 // pred_check_branch
      %1098 = sbr.rel (0) target = $region73
    $region72: #{_lambda_.1} parent=1 // pred_region
      %1099 = dma.done [#allocation3], 16
    $region73: #{_lambda_.1} parent=1 // pred_fallthru
      _
    %1100 = vsyncpa [#allocation3], 1

</llo_original>
